<compile_context>
chip_gen: v5e
topology: v5e:2x2
jax: 0.10.0
libtpu: 0.0.40
codegen_flags: <defaults>
</compile_context>

<pallas_src>
import jax
import jax.numpy as jnp
from jax.experimental import pallas as pl
from jax.experimental.pallas import tpu as pltpu


def _identity_alias_kernel(in_hbm, out_hbm, flag_smem):
    # out_hbm aliases in_hbm (input_output_aliases={0: 0}) and both stay in HBM
    # (memory_space=pl.ANY), so the identity needs no data movement at all.
    # Write one SMEM scalar so the lowered kernel body is non-empty; this costs
    # a single scalar store.
    del in_hbm, out_hbm
    flag_smem[0] = jnp.int32(1)


def _identity_copy_kernel(in_hbm, out_hbm, sem):
    # Materialized identity: one whole-array HBM->HBM DMA.  No VMEM staging, no
    # vector loads/stores — just one DMA descriptor running at HBM bandwidth.
    # (For multi-GiB inputs one would chunk this into a few outstanding
    # descriptors; unnecessary at realistic embedding sizes.)
    cp = pltpu.make_async_copy(in_hbm, out_hbm, sem)
    cp.start()
    cp.wait()


def flat_reconstruction_forward(embedding, *, materialize=False):
    """FlatReconstruction.forward: identity through an empty decoder.

    materialize=False (default): output aliases the input buffer (zero-copy).
    materialize=True: output is a fresh buffer filled by a single HBM->HBM DMA.
    """
    out_shape = jax.ShapeDtypeStruct(embedding.shape, embedding.dtype)
    nbytes = embedding.size * jnp.dtype(embedding.dtype).itemsize

    if not materialize:
        return pl.pallas_call(
            _identity_alias_kernel,
            out_shape=out_shape,
            in_specs=[pl.BlockSpec(memory_space=pl.ANY)],
            out_specs=pl.BlockSpec(memory_space=pl.ANY),
            scratch_shapes=[pltpu.SMEM((1,), jnp.int32)],
            input_output_aliases={0: 0},
            cost_estimate=pl.CostEstimate(
                flops=0, transcendentals=0, bytes_accessed=0),
        )(embedding)

    return pl.pallas_call(
        _identity_copy_kernel,
        out_shape=out_shape,
        in_specs=[pl.BlockSpec(memory_space=pl.ANY)],
        out_specs=pl.BlockSpec(memory_space=pl.ANY),
        scratch_shapes=[pltpu.SemaphoreType.DMA],
        cost_estimate=pl.CostEstimate(
            flops=0, transcendentals=0, bytes_accessed=2 * nbytes),
    )(embedding)


if __name__ == "__main__":
    # Small shapes consistent with the module: batch=16 rows, output_size=128.
    batch = 16
    output_size = 128

    key = jax.random.PRNGKey(0)
    embedding = jax.random.normal(key, (batch, output_size), jnp.float32)

    # Default zero-copy path: output aliases input through the custom call.
    obs_pred = flat_reconstruction_forward(embedding)
    obs_pred = jax.block_until_ready(obs_pred)
    assert obs_pred.shape == embedding.shape
    assert obs_pred.dtype == embedding.dtype
    assert jnp.array_equal(obs_pred, embedding), "alias path mismatch vs identity"

    # Materialized-copy path (fresh buffer via a single HBM->HBM DMA).
    obs_pred_copy = flat_reconstruction_forward(embedding, materialize=True)
    obs_pred_copy = jax.block_until_ready(obs_pred_copy)
    assert obs_pred_copy.shape == embedding.shape
    assert obs_pred_copy.dtype == embedding.dtype
    assert jnp.array_equal(obs_pred_copy, embedding), "copy path mismatch vs identity"

    print("KERNEL_OK")
</pallas_src>

<mosaic_0001>
module attributes {stable_mosaic.version = 11 : i64} {
  func.func @_identity_alias_kernel(%arg0: memref<16x128xf32, #tpu.memory_space<any>>, %arg1: memref<16x128xf32, #tpu.memory_space<any>>, %arg2: memref<1xi32, #tpu.memory_space<smem>>) attributes {dimension_semantics = [], scalar_prefetch = 0 : i64, scratch_operands = 1 : i64, tpu.core_type = #tpu.core_type<tc>} {
    %c1_i32 = arith.constant 1 : i32
    %c0 = arith.constant 0 : index
    %0 = memref.load %arg2[%c0] : memref<1xi32, #tpu.memory_space<smem>>
    memref.store %c1_i32, %arg2[%c0] : memref<1xi32, #tpu.memory_space<smem>>
    return
  }
}

</mosaic_0001>

<llo_original>
// kernel: tpu_custom_call.1
$region0: #{tpu_custom_call.1}
  #allocation0 [shape = 'u32[]', space=smem, size = 0x4, offset = 0x4, fixed_abs, tag = 'smem constant byte address 0x4 - core index']
  #allocation1 [shape = 'u32[72,128]{1,0:T(1,128)}', space=vmem, size = 0x9000, scoped, tag = 'internal scratch']
  #allocation2 [shape = 's32[1]{0:T(128)}', space=smem, size = 0x200, scoped, tag = 'scratch operand']
  %s0 = inlined_call_operand.hbm [shape: f32[16,128], index: 0, kind: input, shape index: {}, may-alias: {0,1}]
  %s1 = inlined_call_operand.hbm [shape: f32[16,128], index: 1, kind: output, shape index: {}, may-alias: {0,1}]
  %s2 = sld [smem:[#allocation0]]
  $region2: #{tpu_custom_call.1} parent=0
    _
  %s4 = ssub.s32 1, %s2
  %s5 = scalar_select 0, %s4, %s2
  %s6 = scalar_lea.smem [#allocation2], 0
  %7 = sst [smem:[%s6]] 1

</llo_original>
